<compile_context>
chip_gen: v7x
topology: tpu7x:2x2x1
jax: 0.10.0
libtpu: 0.0.40
codegen_flags: <defaults>
</compile_context>

<pallas_src>
import functools

import jax
import jax.numpy as jnp
from jax.experimental import pallas as pl
from jax.experimental.pallas import tpu as pltpu


_MIB = 1024 * 1024
_PAD_PENALTY = 1e30          # padded class lanes: adj ~= -1e30 -> exp() == 0
_C_STREAM_THRESHOLD = 8192   # stream the class axis above this many lanes
_STREAM_TILE_C = 2048


def _round_up(x: int, m: int) -> int:
    return ((x + m - 1) // m) * m


def _tpu_generation():
    """Return (vmem_limit_bytes, is_multi_core) with safe fallbacks."""
    vmem_cap = None
    try:
        vmem_cap = int(pltpu.get_tpu_info().vmem_capacity_bytes)
    except Exception:
        pass
    kind = ""
    try:
        kind = jax.devices()[0].device_kind.lower()
    except Exception:
        pass
    is_v7 = ("v7" in kind) or ("7x" in kind) or (
        vmem_cap is not None and vmem_cap <= 64 * _MIB)
    big_vmem = (vmem_cap is not None and vmem_cap > 64 * _MIB) or any(
        t in kind for t in ("v2", "v3", "v4", "v5", "v6"))
    if is_v7:
        vmem_limit = 48 * _MIB          # 64 MiB physical per TC on v7x
    elif big_vmem:
        vmem_limit = 96 * _MIB          # 128 MiB physical on v5e/v6e
    else:
        vmem_limit = 48 * _MIB          # unknown chip: stay conservative
    if vmem_cap is not None:
        vmem_limit = min(vmem_limit, (vmem_cap * 3) // 4)
    return vmem_limit, is_v7


def _native_bf16_compute():
    """True on chips with bf16-native VPU/EUP (v6e / v7x); False on v5e and older."""
    try:
        kind = jax.devices()[0].device_kind.lower()
    except Exception:
        return False
    return not any(t in kind for t in ("v2", "v3", "v4", "v5"))


def _auto_tile_b(B, tile_c, in_itemsize, compute_itemsize, budget_bytes,
                 sublane, multi_core):
    """Largest batch tile whose per-step VMEM working set fits the budget."""
    # Per-row footprint of one grid step:
    #   * double-buffered logits input tile
    #   * ~4 (TILE_B, TILE_C) compute-dtype intermediates (adj/shifted/exp/where)
    #   * ~2 (TILE_B, TILE_C) int32 intermediates (class iota / compare)
    #   * lane-padded (TILE_B, 1) columns: 3 f32 scratch + transients + int32 y
    per_row = (2 * tile_c * in_itemsize
               + 4 * tile_c * compute_itemsize
               + 2 * tile_c * 4
               + 12 * 512)
    rows = max(sublane, (budget_bytes // per_row) // sublane * sublane)
    tile_b = min(rows, 4096, _round_up(B, sublane))
    if multi_core and B > 2 * sublane:
        # keep >= 2 (ideally >= 4) batch tiles so both TensorCores get work (v7x)
        want = 4 if B >= 4 * sublane else 2
        tile_b = min(tile_b, max(sublane, _round_up(-(-B // want), sublane)))
    return max(sublane, (tile_b // sublane) * sublane)


def _calibrated_loss_kernel(logit_ref, penalty_ref, y_ref, out_ref,
                            m_sc, l_sc, pick_sc, *,
                            n_valid, tile_b, tile_c, compute_dtype):
    i = pl.program_id(0)            # batch tile  (parallel)
    c = pl.program_id(1)            # class tile  (arbitrary / reduction)
    n_c = pl.num_programs(1)

    @pl.when(c == 0)
    def _init():
        m_sc[...] = jnp.full_like(m_sc, -jnp.inf)
        l_sc[...] = jnp.zeros_like(l_sc)
        pick_sc[...] = jnp.zeros_like(pick_sc)

    logits = logit_ref[...].astype(compute_dtype)              # (TB, TC)
    penalty = penalty_ref[...].astype(compute_dtype)           # (1,  TC)
    adj = logits - penalty                                      # (TB, TC)

    # --- streaming (online) logsumexp over class tiles, f32 accumulation ---
    m_old = m_sc[...]                                           # (TB, 1) f32
    m_tile = jnp.max(adj, axis=-1, keepdims=True).astype(jnp.float32)
    m_new = jnp.maximum(m_old, m_tile)
    shifted = adj - m_new.astype(compute_dtype)                 # (TB, TC)
    p_sum = jnp.sum(jnp.exp(shifted), axis=-1, keepdims=True,
                    dtype=jnp.float32)                          # (TB, 1) f32
    alpha = jnp.exp(m_old - m_new)                              # (TB, 1) f32
    l_sc[...] = alpha * l_sc[...] + p_sum
    m_sc[...] = m_new

    # --- fused label gather: accumulate adj[y] (global class index) ---
    cls = c * tile_c + jax.lax.broadcasted_iota(jnp.int32, adj.shape, 1)
    y = y_ref[...]                                              # (TB, 1) int32
    pick_sc[...] += jnp.sum(jnp.where(cls == y, adj, 0.0),
                            axis=-1, keepdims=True, dtype=jnp.float32)

    @pl.when(c == n_c - 1)
    def _finalize():
        # nll = logsumexp(adj) - adj[y]
        nll = m_sc[...] + jnp.log(l_sc[...]) - pick_sc[...]     # (TB, 1) f32
        row = i * tile_b + jax.lax.broadcasted_iota(jnp.int32, nll.shape, 0)
        nll = jnp.where(row < n_valid, nll, 0.0)                # drop batch padding
        partial = jnp.sum(nll)
        # lane-dense (8, 128) slab with the partial sum in [0, 0]
        sub = jax.lax.broadcasted_iota(jnp.int32, out_ref.shape, 0)
        lane = jax.lax.broadcasted_iota(jnp.int32, out_ref.shape, 1)
        out_ref[...] = jnp.where((sub == 0) & (lane == 0), partial, 0.0)


def calibrated_loss(logit, label_distrib, y, *, tau, reduction="mean",
                    tile_b=None, tile_c=None):
    """logit: (B, C) float (any dtype), label_distrib: (C,) float, y: (B,) int
    -> scalar f32 loss (cross-entropy of the calibrated logits)."""
    B, C = logit.shape
    vmem_limit, multi_core = _tpu_generation()

    in_itemsize = jnp.dtype(logit.dtype).itemsize
    compute_dtype = (jnp.bfloat16
                     if (jnp.dtype(logit.dtype) == jnp.bfloat16
                         and _native_bf16_compute())
                     else jnp.float32)
    compute_itemsize = jnp.dtype(compute_dtype).itemsize
    sublane = max(8, 32 // in_itemsize)     # 8 (f32) / 16 (bf16) / 32 (int8/fp8)

    # ---- class-axis tiling ----
    C_pad = _round_up(C, 128)
    if tile_c is None:
        tile_c = C_pad if C_pad <= _C_STREAM_THRESHOLD else _STREAM_TILE_C
    tile_c = _round_up(min(int(tile_c), C_pad), 128)
    C_pad = _round_up(C_pad, tile_c)
    num_c_tiles = C_pad // tile_c

    # ---- batch-axis tiling (byte-budgeted, generation-aware) ----
    if tile_b is None:
        tile_b = _auto_tile_b(B, tile_c, in_itemsize, compute_itemsize,
                              vmem_limit // 2, sublane, multi_core)
    tile_b = max(sublane, _round_up(int(tile_b), sublane))
    B_pad = _round_up(B, tile_b)
    num_b_tiles = B_pad // tile_b

    # ---- wrapper-side layout plumbing (tiny XLA ops only) ----
    # Penalty row computed once; padded class lanes get +1e30 so the adjusted
    # logit is ~-1e30 (excluded from the softmax for ANY input dtype).
    penalty = (float(tau) *
               label_distrib.astype(jnp.float32) ** (-0.25)).reshape(1, C)
    if C_pad > C:
        penalty = jnp.pad(penalty, ((0, 0), (0, C_pad - C)),
                          constant_values=_PAD_PENALTY)

    logit_p = logit
    if C_pad > C:
        logit_p = jnp.pad(logit_p, ((0, 0), (0, C_pad - C)))
    if B_pad > B:
        logit_p = jnp.pad(logit_p, ((0, B_pad - B), (0, 0)))

    y_p = y.astype(jnp.int32).reshape(B, 1)
    if B_pad > B:
        y_p = jnp.pad(y_p, ((0, B_pad - B), (0, 0)))

    kernel = functools.partial(_calibrated_loss_kernel,
                               n_valid=B, tile_b=tile_b, tile_c=tile_c,
                               compute_dtype=compute_dtype)

    partials = pl.pallas_call(
        kernel,
        out_shape=jax.ShapeDtypeStruct((num_b_tiles * 8, 128), jnp.float32),
        grid_spec=pltpu.PrefetchScalarGridSpec(
            num_scalar_prefetch=0,
            grid=(num_b_tiles, num_c_tiles),
            in_specs=[
                # (Candidate sweep once tiles are locked: pipeline_mode=pl.Buffered(3)
                #  on the logits spec if the input DMA shows up as exposed.)
                pl.BlockSpec((tile_b, tile_c), lambda i, c: (i, c)),  # logits
                pl.BlockSpec((1, tile_c), lambda i, c: (0, c)),       # penalty row
                pl.BlockSpec((tile_b, 1), lambda i, c: (i, 0)),       # labels
            ],
            out_specs=pl.BlockSpec((8, 128), lambda i, c: (i, 0)),    # partial sums
            scratch_shapes=[pltpu.VMEM((tile_b, 1), jnp.float32),     # running max
                            pltpu.VMEM((tile_b, 1), jnp.float32),     # running sumexp
                            pltpu.VMEM((tile_b, 1), jnp.float32)],    # picked adj[y]
        ),
        compiler_params=pltpu.CompilerParams(
            dimension_semantics=("parallel", "arbitrary"),
            vmem_limit_bytes=vmem_limit,
        ),
    )(logit_p, penalty, y_p)

    total = jnp.sum(partials)
    if reduction == "mean":
        total = total / jnp.float32(B)
    return total


def _reference(logit, label_distrib, y, tau, reduction="mean"):
    adj = (logit.astype(jnp.float32)
           - tau * label_distrib[None, :].astype(jnp.float32) ** (-0.25))
    logp = jax.nn.log_softmax(adj, axis=-1)
    nll = -jnp.take_along_axis(logp, y[:, None], axis=-1)[:, 0]
    return jnp.mean(nll) if reduction == "mean" else jnp.sum(nll)


if __name__ == "__main__":
    key = jax.random.PRNGKey(0)
    k1, k2, k3 = jax.random.split(key, 3)

    # Case 1: small shapes matching the module spec (mean reduction).
    B, C, tau = 8, 10, 0.5
    logit = jax.random.normal(k1, (B, C), dtype=jnp.float32)
    label_distrib = jax.random.uniform(k2, (C,), minval=0.1, maxval=1.0,
                                       dtype=jnp.float32)
    y = jax.random.randint(k3, (B,), 0, C, dtype=jnp.int32)

    loss = jax.block_until_ready(
        calibrated_loss(logit, label_distrib, y, tau=tau, reduction="mean"))
    ref = _reference(logit, label_distrib, y, tau, "mean")
    assert jnp.allclose(loss, ref, atol=1e-4, rtol=1e-4), (loss, ref)

    # Case 2: non-aligned B/C, multi-batch-tile grid with batch/class padding,
    # sum reduction, forced small batch tile to exercise the pipeline path.
    k4, k5, k6 = jax.random.split(jax.random.PRNGKey(1), 3)
    B2, C2, tau2 = 137, 200, 1.0
    logit2 = jax.random.normal(k4, (B2, C2), dtype=jnp.float32)
    distrib2 = jax.random.uniform(k5, (C2,), minval=0.05, maxval=1.0,
                                  dtype=jnp.float32)
    y2 = jax.random.randint(k6, (B2,), 0, C2, dtype=jnp.int32)

    loss2 = jax.block_until_ready(
        calibrated_loss(logit2, distrib2, y2, tau=tau2, reduction="sum",
                        tile_b=64))
    ref2 = _reference(logit2, distrib2, y2, tau2, "sum")
    assert jnp.allclose(loss2, ref2, atol=1e-3, rtol=1e-4), (loss2, ref2)

    # Case 3: forced class tiling (tile_c < C_pad) exercises the streaming
    # online-logsumexp path (the large-C path) at small shapes.
    k7, k8, k9 = jax.random.split(jax.random.PRNGKey(2), 3)
    B3, C3, tau3 = 24, 300, 0.75
    logit3 = jax.random.normal(k7, (B3, C3), dtype=jnp.float32)
    distrib3 = jax.random.uniform(k8, (C3,), minval=0.05, maxval=1.0,
                                  dtype=jnp.float32)
    y3 = jax.random.randint(k9, (B3,), 0, C3, dtype=jnp.int32)

    loss3 = jax.block_until_ready(
        calibrated_loss(logit3, distrib3, y3, tau=tau3, reduction="mean",
                        tile_c=128))
    ref3 = _reference(logit3, distrib3, y3, tau3, "mean")
    assert jnp.allclose(loss3, ref3, atol=1e-4, rtol=1e-4), (loss3, ref3)

    # Case 4: bf16 inputs (bf16 intermediates on v6e/v7x, f32 fallback on v5e).
    ka, kb, kc = jax.random.split(jax.random.PRNGKey(3), 3)
    B4, C4, tau4 = 64, 50, 0.5
    logit4 = jax.random.normal(ka, (B4, C4), dtype=jnp.bfloat16)
    distrib4 = jax.random.uniform(kb, (C4,), minval=0.1, maxval=1.0,
                                  dtype=jnp.float32)
    y4 = jax.random.randint(kc, (B4,), 0, C4, dtype=jnp.int32)

    loss4 = jax.block_until_ready(
        calibrated_loss(logit4, distrib4, y4, tau=tau4, reduction="mean"))
    ref4 = _reference(logit4, distrib4, y4, tau4, "mean")
    assert jnp.allclose(loss4, ref4, atol=5e-2, rtol=5e-2), (loss4, ref4)

    print("KERNEL_OK")
</pallas_src>

<mosaic_0001>
module attributes {stable_mosaic.version = 11 : i64} {
  func.func @_calibrated_loss_kernel(%arg0: i32, %arg1: i32, %arg2: memref<8x128xf32, #tpu.memory_space<vmem>>, %arg3: memref<1x128xf32, #tpu.memory_space<vmem>>, %arg4: memref<8x1xi32, #tpu.memory_space<vmem>>, %arg5: memref<8x128xf32, #tpu.memory_space<vmem>>, %arg6: memref<8x1xf32, #tpu.memory_space<vmem>>, %arg7: memref<8x1xf32, #tpu.memory_space<vmem>>, %arg8: memref<8x1xf32, #tpu.memory_space<vmem>>) attributes {dimension_semantics = [#tpu.dimension_semantics<parallel>, #tpu.dimension_semantics<arbitrary>], iteration_bounds = array<i64: 1, 1>, scalar_prefetch = 0 : i64, scratch_operands = 3 : i64, tpu.core_type = #tpu.core_type<tc>, window_params = [{transform_indices = @transform_0, window_bounds = array<i64: 8, 128>}, {transform_indices = @transform_1, window_bounds = array<i64: 1, 128>}, {transform_indices = @transform_2, window_bounds = array<i64: 8, 1>}, {transform_indices = @transform_3, window_bounds = array<i64: 8, 128>}]} {
    %c0_i32 = arith.constant 0 : i32
    %0 = arith.cmpi eq, %arg1, %c0_i32 : i32
    %1 = arith.extui %0 : i1 to i32
    %c0_i32_0 = arith.constant 0 : i32
    %2 = arith.cmpi ne, %1, %c0_i32_0 : i32
    scf.if %2 {
      %cst_23 = arith.constant 0xFF800000 : f32
      %40 = vector.broadcast %cst_23 : f32 to vector<8x1xf32>
      %c0_24 = arith.constant 0 : index
      %c0_25 = arith.constant 0 : index
      %41 = vector.load %arg6[%c0_24, %c0_25] : memref<8x1xf32, #tpu.memory_space<vmem>>, vector<8x1xf32>
      tpu.vector_store %arg6[%c0_24, %c0_25], %40 {strides = array<i32>} : memref<8x1xf32, #tpu.memory_space<vmem>>, vector<8x1xf32>,
      %cst_26 = arith.constant 0.000000e+00 : f32
      %42 = vector.broadcast %cst_26 : f32 to vector<8x1xf32>
      %c0_27 = arith.constant 0 : index
      %c0_28 = arith.constant 0 : index
      %43 = vector.load %arg7[%c0_27, %c0_28] : memref<8x1xf32, #tpu.memory_space<vmem>>, vector<8x1xf32>
      tpu.vector_store %arg7[%c0_27, %c0_28], %42 {strides = array<i32>} : memref<8x1xf32, #tpu.memory_space<vmem>>, vector<8x1xf32>,
      %cst_29 = arith.constant 0.000000e+00 : f32
      %44 = vector.broadcast %cst_29 : f32 to vector<8x1xf32>
      %c0_30 = arith.constant 0 : index
      %c0_31 = arith.constant 0 : index
      %45 = vector.load %arg8[%c0_30, %c0_31] : memref<8x1xf32, #tpu.memory_space<vmem>>, vector<8x1xf32>
      tpu.vector_store %arg8[%c0_30, %c0_31], %44 {strides = array<i32>} : memref<8x1xf32, #tpu.memory_space<vmem>>, vector<8x1xf32>,
    } else {
    }
    %c0 = arith.constant 0 : index
    %c0_1 = arith.constant 0 : index
    %3 = vector.load %arg2[%c0, %c0_1] : memref<8x128xf32, #tpu.memory_space<vmem>>, vector<8x128xf32>
    %c0_2 = arith.constant 0 : index
    %c0_3 = arith.constant 0 : index
    %4 = vector.load %arg3[%c0_2, %c0_3] : memref<1x128xf32, #tpu.memory_space<vmem>>, vector<1x128xf32>
    %5 = vector.broadcast %4 : vector<1x128xf32> to vector<8x128xf32>
    %6 = arith.subf %3, %5 : vector<8x128xf32>
    %c0_4 = arith.constant 0 : index
    %c0_5 = arith.constant 0 : index
    %7 = vector.load %arg6[%c0_4, %c0_5] : memref<8x1xf32, #tpu.memory_space<vmem>>, vector<8x1xf32>
    %cst = arith.constant dense<0xFF800000> : vector<8xf32>
    %8 = vector.multi_reduction <maximumf>, %6, %cst [1] : vector<8x128xf32> to vector<8xf32>
    %9 = vector.shape_cast %8 : vector<8xf32> to vector<8x1xf32>
    %10 = arith.maximumf %7, %9 : vector<8x1xf32>
    %11 = vector.broadcast %10 : vector<8x1xf32> to vector<8x128xf32>
    %12 = arith.subf %6, %11 : vector<8x128xf32>
    %13 = math.exp %12 : vector<8x128xf32>
    %cst_6 = arith.constant dense<0.000000e+00> : vector<8xf32>
    %14 = vector.multi_reduction <add>, %13, %cst_6 [1] : vector<8x128xf32> to vector<8xf32>
    %15 = vector.shape_cast %14 : vector<8xf32> to vector<8x1xf32>
    %16 = arith.subf %7, %10 : vector<8x1xf32>
    %17 = math.exp %16 : vector<8x1xf32>
    %c0_7 = arith.constant 0 : index
    %c0_8 = arith.constant 0 : index
    %18 = vector.load %arg7[%c0_7, %c0_8] : memref<8x1xf32, #tpu.memory_space<vmem>>, vector<8x1xf32>
    %19 = arith.mulf %17, %18 : vector<8x1xf32>
    %20 = arith.addf %19, %15 : vector<8x1xf32>
    %c0_9 = arith.constant 0 : index
    %c0_10 = arith.constant 0 : index
    %21 = vector.load %arg7[%c0_9, %c0_10] : memref<8x1xf32, #tpu.memory_space<vmem>>, vector<8x1xf32>
    tpu.vector_store %arg7[%c0_9, %c0_10], %20 {strides = array<i32>} : memref<8x1xf32, #tpu.memory_space<vmem>>, vector<8x1xf32>,
    %c0_11 = arith.constant 0 : index
    %c0_12 = arith.constant 0 : index
    %22 = vector.load %arg6[%c0_11, %c0_12] : memref<8x1xf32, #tpu.memory_space<vmem>>, vector<8x1xf32>
    tpu.vector_store %arg6[%c0_11, %c0_12], %10 {strides = array<i32>} : memref<8x1xf32, #tpu.memory_space<vmem>>, vector<8x1xf32>,
    %c128_i32 = arith.constant 128 : i32
    %23 = arith.muli %arg1, %c128_i32 : i32
    %24 = tpu.iota {dimensions = array<i32: 1>} : vector<8x128xi32>
    %25 = vector.broadcast %23 : i32 to vector<8x128xi32>
    %26 = arith.addi %25, %24 : vector<8x128xi32>
    %c0_13 = arith.constant 0 : index
    %c0_14 = arith.constant 0 : index
    %27 = vector.load %arg4[%c0_13, %c0_14] : memref<8x1xi32, #tpu.memory_space<vmem>>, vector<8x1xi32>
    %c0_15 = arith.constant 0 : index
    %c0_16 = arith.constant 0 : index
    %28 = vector.load %arg8[%c0_15, %c0_16] : memref<8x1xf32, #tpu.memory_space<vmem>>, vector<8x1xf32>
    %29 = vector.broadcast %27 : vector<8x1xi32> to vector<8x128xi32>
    %30 = arith.cmpi eq, %26, %29 : vector<8x128xi32>
    %cst_17 = arith.constant 0.000000e+00 : f32
    %31 = vector.broadcast %cst_17 : f32 to vector<8x128xf32>
    %32 = arith.select %30, %6, %31 : vector<8x128xi1>, vector<8x128xf32>
    %cst_18 = arith.constant dense<0.000000e+00> : vector<8xf32>
    %33 = vector.multi_reduction <add>, %32, %cst_18 [1] : vector<8x128xf32> to vector<8xf32>
    %34 = vector.shape_cast %33 : vector<8xf32> to vector<8x1xf32>
    %35 = arith.addf %28, %34 : vector<8x1xf32>
    %c0_19 = arith.constant 0 : index
    %c0_20 = arith.constant 0 : index
    %36 = vector.load %arg8[%c0_19, %c0_20] : memref<8x1xf32, #tpu.memory_space<vmem>>, vector<8x1xf32>
    tpu.vector_store %arg8[%c0_19, %c0_20], %35 {strides = array<i32>} : memref<8x1xf32, #tpu.memory_space<vmem>>, vector<8x1xf32>,
    %c0_i32_21 = arith.constant 0 : i32
    %37 = arith.cmpi eq, %arg1, %c0_i32_21 : i32
    %38 = arith.extui %37 : i1 to i32
    %c0_i32_22 = arith.constant 0 : i32
    %39 = arith.cmpi ne, %38, %c0_i32_22 : i32
    scf.if %39 {
      %c0_23 = arith.constant 0 : index
      %c0_24 = arith.constant 0 : index
      %40 = vector.load %arg6[%c0_23, %c0_24] : memref<8x1xf32, #tpu.memory_space<vmem>>, vector<8x1xf32>
      %c0_25 = arith.constant 0 : index
      %c0_26 = arith.constant 0 : index
      %41 = vector.load %arg7[%c0_25, %c0_26] : memref<8x1xf32, #tpu.memory_space<vmem>>, vector<8x1xf32>
      %42 = math.log %41 : vector<8x1xf32>
      %43 = arith.addf %40, %42 : vector<8x1xf32>
      %c0_27 = arith.constant 0 : index
      %c0_28 = arith.constant 0 : index
      %44 = vector.load %arg8[%c0_27, %c0_28] : memref<8x1xf32, #tpu.memory_space<vmem>>, vector<8x1xf32>
      %45 = arith.subf %43, %44 : vector<8x1xf32>
      %c8_i32 = arith.constant 8 : i32
      %46 = arith.muli %arg0, %c8_i32 : i32
      %47 = tpu.iota {dimensions = array<i32: 0>} : vector<8x1xi32>
      %48 = vector.broadcast %46 : i32 to vector<8x1xi32>
      %49 = arith.addi %48, %47 : vector<8x1xi32>
      %c8_i32_29 = arith.constant 8 : i32
      %50 = vector.broadcast %c8_i32_29 : i32 to vector<8x1xi32>
      %51 = arith.cmpi slt, %49, %50 : vector<8x1xi32>
      %cst_30 = arith.constant 0.000000e+00 : f32
      %52 = vector.broadcast %cst_30 : f32 to vector<8x1xf32>
      %53 = arith.select %51, %45, %52 : vector<8x1xi1>, vector<8x1xf32>
      %54 = vector.shape_cast %53 : vector<8x1xf32> to vector<1x8x1xf32>
      %cst_31 = arith.constant dense<0.000000e+00> : vector<1xf32>
      %55 = vector.multi_reduction <add>, %54, %cst_31 [1, 2] : vector<1x8x1xf32> to vector<1xf32>
      %56 = vector.shape_cast %55 : vector<1xf32> to vector<1x1x1xf32>
      %57 = vector.extract %56[0, 0, 0] : f32 from vector<1x1x1xf32>
      %58 = tpu.iota {dimensions = array<i32: 0>} : vector<8x128xi32>
      %59 = tpu.iota {dimensions = array<i32: 1>} : vector<8x128xi32>
      %c0_i32_32 = arith.constant 0 : i32
      %60 = vector.broadcast %c0_i32_32 : i32 to vector<8x128xi32>
      %61 = arith.cmpi eq, %58, %60 : vector<8x128xi32>
      %c0_i32_33 = arith.constant 0 : i32
      %62 = vector.broadcast %c0_i32_33 : i32 to vector<8x128xi32>
      %63 = arith.cmpi eq, %59, %62 : vector<8x128xi32>
      %64 = arith.andi %61, %63 : vector<8x128xi1>
      %cst_34 = arith.constant 0.000000e+00 : f32
      %65 = vector.broadcast %57 : f32 to vector<8x128xf32>
      %66 = vector.broadcast %cst_34 : f32 to vector<8x128xf32>
      %67 = arith.select %64, %65, %66 : vector<8x128xi1>, vector<8x128xf32>
      %c0_35 = arith.constant 0 : index
      %c0_36 = arith.constant 0 : index
      %68 = vector.load %arg5[%c0_35, %c0_36] : memref<8x128xf32, #tpu.memory_space<vmem>>, vector<8x128xf32>
      tpu.vector_store %arg5[%c0_35, %c0_36], %67 {strides = array<i32>} : memref<8x128xf32, #tpu.memory_space<vmem>>, vector<8x128xf32>,
    } else {
    }
    return
  }
  func.func @transform_0(%arg0: i32, %arg1: i32) -> (i32, i32) {
    %c0_i32 = arith.constant 0 : i32
    return %arg0, %arg1 : i32, i32
  }
  func.func @transform_1(%arg0: i32, %arg1: i32) -> (i32, i32) {
    %c0_i32 = arith.constant 0 : i32
    %c0_i32_0 = arith.constant 0 : i32
    return %c0_i32, %arg1 : i32, i32
  }
  func.func @transform_2(%arg0: i32, %arg1: i32) -> (i32, i32) {
    %c0_i32 = arith.constant 0 : i32
    %c0_i32_0 = arith.constant 0 : i32
    return %arg0, %c0_i32 : i32, i32
  }
  func.func @transform_3(%arg0: i32, %arg1: i32) -> (i32, i32) {
    %c0_i32 = arith.constant 0 : i32
    %c0_i32_0 = arith.constant 0 : i32
    return %arg0, %c0_i32 : i32, i32
  }
}

</mosaic_0001>

<llo_original>
// kernel: tpu_custom_call.1
$region0: #{tpu_custom_call.1}
  #allocation0 [shape = 'u32[]', space=smem, size = 0x4, offset = 0x4, fixed_abs, tag = 'smem constant byte address 0x4 - core index']
  #allocation1 [shape = 'u32[144,128]{1,0:T(1,128)}', space=vmem, size = 0x12000, scoped, tag = 'internal scratch']
  #allocation2 [shape = 'f32[8,1]{1,0:T(8,128)}', space=vmem, size = 0x1000, scoped, tag = 'scratch operand']
  #allocation3 [shape = 'f32[8,1]{1,0:T(8,128)}', space=vmem, size = 0x1000, scoped, tag = 'scratch operand']
  #allocation4 [shape = 'f32[8,1]{1,0:T(8,128)}', space=vmem, size = 0x1000, scoped, tag = 'scratch operand']
  %s0 = inlined_call_operand.vmem [shape: f32[8,128], index: 0, kind: input, shape index: {}]
  %s1 = inlined_call_operand.vmem [shape: f32[1,128], index: 1, kind: input, shape index: {}]
  %s2 = inlined_call_operand.vmem [shape: s32[8,1], index: 2, kind: input, shape index: {}]
  %s3 = inlined_call_operand.hbm [shape: f32[8,128], index: 3, kind: output, shape index: {}]
  %s4 = sld [smem:[#allocation0]]
  $region30: #{tpu_custom_call.1} parent=0
    _
  %s6 = ssub.s32 1, %s4
  %s7 = scalar_select 0, %s6, %s4
  $region1: #{tpu_custom_call.1} parent=0
    #allocation5 [shape = 'u8[4096]{0}', space=vmem, size = 0x1000, scoped, tag = 'output window, operand 0, single buffered']
    #allocation6 [shape = 's32[1]{0}', space=sflag, size = 0x4, scoped, tag = 'scoped memory for tpu_custom_call.1']
    %8 = vsyncpa [#allocation6], 0
    // Predicated region
    $region2: #{tpu_custom_call.1} parent=1 // pred_check
      _
    $region3: #{tpu_custom_call.1} parent=1 // pred_check_branch
      %10 = sbr.rel (0) target = $region5
    $region4: #{tpu_custom_call.1} parent=1 // pred_region
      _
    $region5: #{tpu_custom_call.1} parent=1 // pred_fallthru
      _
    // Predicated region
    $region6: #{tpu_custom_call.1} parent=1 // pred_check
      _
    $region7: #{tpu_custom_call.1} parent=1 // pred_check_branch
      %12 = sbr.rel (0) target = $region9
    $region8: #{tpu_custom_call.1} parent=1 // pred_region
      _
    $region9: #{tpu_custom_call.1} parent=1 // pred_fallthru
      _
    // Predicated region
    $region10: #{tpu_custom_call.1} parent=1 // pred_check
      _
    $region11: #{tpu_custom_call.1} parent=1 // pred_check_branch
      %14 = sbr.rel (0) target = $region13
    $region12: #{tpu_custom_call.1} parent=1 // pred_region
      _
    $region13: #{tpu_custom_call.1} parent=1 // pred_fallthru
      _
    %p15 = scmp.eq.s32.totalorder 0, 0
    // Predicated region
    $region14: #{tpu_custom_call.1} parent=1 // pred_check
      %p16 = pneg %p15
    $region15: #{tpu_custom_call.1} parent=1 // pred_check_branch
      %18 = sbr.rel (%p16) target = $region17
    $region16: #{tpu_custom_call.1} parent=1 // pred_region
      %vm19 = vcmask 7168
      %20 = vst.msk [vmem:[#allocation2] sm:$0xff] %vm19, -inf
      %21 = vst.msk [vmem:[#allocation3] sm:$0xff] %vm19, 0.0
      %22 = vst.msk [vmem:[#allocation4] sm:$0xff] %vm19, 0.0
    $region17: #{tpu_custom_call.1} parent=1 // pred_fallthru
      _
    %v23 = vld [vmem:[%s0] sm:$0xff]
    %v24 = vld [vmem:[%s1] sm:$0x1]
    %v26 = vlaneseq
    %v27 = vshrl.u32 %v26, 7
    %v28 = vsub.s32 0, %v27
    %v29 = vrot.slane %v24, %v28
    %v31 = vsub.f32 %v23, %v29
    %v32 = vld [vmem:[#allocation2] sm:$0xff]
    %33 = vmax.xlane.f32.xlu0 %v31
    %v34 = vpop.xlane.xlu0 %33
    %v35 = vmax.f32 %v32, %v34
    %37 = vset.pattern.permute.xlu0 0
    %38 = vperm.xlu0 %37, %v35
    %v39 = vpop.permute.xlu0 %38
    %v41 = vsub.f32 %v31, %v39
    %v42 = vmul.f32 %v41, 1.442695
    %v43 = vpow.pop %v42
    %44 = vadd.xlane.f32.xlu0 %v43
    %v45 = vpop.xlane.xlu0 %44
    %v46 = vsub.f32 %v32, %v35
    %v47 = vmul.f32 %v46, 1.442695
    %v48 = vpow.pop %v47
    %v49 = vld [vmem:[#allocation3] sm:$0xff]
    %v50 = vmul.f32 %v48, %v49
    %v51 = vadd.f32 %v50, %v45
    %vm52 = vcmask 7168
    %53 = vst.msk [vmem:[#allocation3] sm:$0xff] %vm52, %v51
    %54 = vst.msk [vmem:[#allocation2] sm:$0xff] %vm52, %v35
    %s55 = smul.u32 0, 128
    %v56 = vlaneseq
    %v57 = vand.u32 %v56, 127
    %v58 = vstv %s55
    %v59 = vadd.s32 %v58, %v57
    %v60 = vld [vmem:[%s2] sm:$0xff]
    %v61 = vld [vmem:[#allocation4] sm:$0xff]
    %62 = vset.pattern.permute.xlu0 0
    %63 = vperm.xlu0 %62, %v60
    %v64 = vpop.permute.xlu0 %63
    %vm65 = vcmp.eq.s32.totalorder %v59, %v64
    %v66 = vsel %vm65, %v31, 0.0
    %67 = vadd.xlane.f32.xlu0 %v66
    %v68 = vpop.xlane.xlu0 %67
    %v69 = vadd.f32 %v61, %v68
    %70 = vst.msk [vmem:[#allocation4] sm:$0xff] %vm52, %v69
    // Predicated region
    $region18: #{tpu_custom_call.1} parent=1 // pred_check
      %p71 = pneg %p15
    $region19: #{tpu_custom_call.1} parent=1 // pred_check_branch
      %73 = sbr.rel (%p71) target = $region21
    $region20: #{tpu_custom_call.1} parent=1 // pred_region
      %v74 = vld [vmem:[#allocation2] sm:$0xff]
      %v75 = vld [vmem:[#allocation3] sm:$0xff]
      %v76 = vlog2.pop %v75
      %v77 = vmul.f32 %v76, 0.6931472
      %v78 = vadd.f32 %v74, %v77
      %v79 = vld [vmem:[#allocation4] sm:$0xff]
      %v80 = vsub.f32 %v78, %v79
      %s81 = smul.u32 0, 8
      %v82 = vlaneseq
      %v83 = vshrl.u32 %v82, 7
      %v84 = vstv %s81
      %v85 = vadd.s32 %v84, %v83
      %vm86 = vcmp.lt.s32.totalorder %v85, 8
      %v87 = vsel %vm86, %v80, 0.0
      %v88 = vsel %vm52, %v87, 0.0
      %89 = vadd.xlane.f32.xlu0 %v88
      %v90 = vpop.xlane.xlu0 %89
      %v91 = vrot.slane %v90, 4
      %v92 = vadd.f32 %v90, %v91
      %v93 = vrot.slane %v92, 2
      %v94 = vadd.f32 %v92, %v93
      %v95 = vrot.slane %v94, 1
      %v96 = vadd.f32 %v94, %v95
      %s97 = vtos %v96
      %vm98 = vcmp.eq.s32.totalorder %v83, 0
      %vm99 = vcmp.eq.s32.totalorder %v57, 0
      %vm100 = vmand %vm98, %vm99
      %v101 = vstv %s97
      %v102 = vsel %vm100, %v101, 0.0
      %103 = vst [vmem:[#allocation5] sm:$0xff] %v102
    $region21: #{tpu_custom_call.1} parent=1 // pred_fallthru
      _
    // Predicated region
    $region22: #{tpu_custom_call.1} parent=1 // pred_check
      _
    $region23: #{tpu_custom_call.1} parent=1 // pred_check_branch
      %105 = sbr.rel (0) target = $region25
    $region24: #{tpu_custom_call.1} parent=1 // pred_region
      %s107 = ssub.s32 128, 128
      %108 = vsyncadd [#allocation6], %s107
      %s110 = sshll.u32 [#allocation5], 4
      %s111 = int_to_ptr.vmem [resolvable:$true] %s110
      %113 = dma.vmem_to_hbm [thread:$0]  %s111, 128, %s3, [#allocation6]
    $region25: #{tpu_custom_call.1} parent=1 // pred_fallthru
      _
    // Predicated region
    $region26: #{tpu_custom_call.1} parent=1 // pred_check
      _
    $region27: #{tpu_custom_call.1} parent=1 // pred_check_branch
      %115 = sbr.rel (0) target = $region29
    $region28: #{tpu_custom_call.1} parent=1 // pred_region
      %116 = dma.done [#allocation6], 128
    $region29: #{tpu_custom_call.1} parent=1 // pred_fallthru
      _
    %117 = vsyncpa [#allocation6], 1

</llo_original>
